<compile_context>
chip_gen: v7x
topology: tpu7x:2x2x1
jax: 0.10.0
libtpu: 0.0.40
codegen_flags: <defaults>
</compile_context>

<pallas_src>
import functools

import jax
import jax.numpy as jnp
from jax import lax
from jax.experimental import pallas as pl
from jax.experimental.pallas import tpu as pltpu


def _round_up(x, m):
    return (x + m - 1) // m * m


# ------------------------------ fused kernel ------------------------------- #

def _lll_fused_kernel(x_ref, wconv_ref, bconv_ref, gap_ref, wcombt_ref, bcomb_ref,
                      comb_ref, *pod_refs, tb, hwp, compute_dtype, with_pod):
    """Fused conv3x3 + bias + ReLU + GAP + (fc & all heads) for TB images.

    x_ref      : [1, K9P, TB*HWP]   compute  im2col block (images folded on lanes)
    wconv_ref  : [COUTP, K9P]       compute  conv taps (tap-major, Cin-minor)
    bconv_ref  : [COUTP, 1]         f32
    gap_ref    : [1, HWP]           f32      1/(H*W) on valid lanes, 0 on lane padding
    wcombt_ref : [COMBP, COUTP]     compute  [Wfc^T | Wfc^T @ Wheads]^T (pre-combined)
    bcomb_ref  : [COMBP, 1]         f32      [bfc | bfc @ Wheads]
    comb_ref   : [1, COMBP, TB]     f32 out  features ++ all head outputs
    pod_ref    : [1, COUTP, TB*HWP] out      post-ReLU conv map (only if with_pod)
    """
    x = x_ref[0]                                                     # [K9P, TB*HWP]

    # conv3x3(pad=1) as ONE MXU matmul over the pre-gathered im2col block.
    conv = jnp.dot(wconv_ref[...], x, preferred_element_type=jnp.float32)
    fmap = jnp.maximum(conv + bconv_ref[...], 0.0)                   # [COUTP, TB*HWP] f32

    if with_pod:
        pod_refs[0][0] = fmap.astype(pod_refs[0].dtype)              # lane-dense store

    # Global average pool per image (each image owns a static 128-aligned lane chunk).
    pooled_cols = []
    for b in range(tb):                                              # static unroll
        fb = fmap[:, b * hwp:(b + 1) * hwp]                          # [COUTP, HWP]
        pooled_cols.append(jnp.sum(fb * gap_ref[...], axis=-1, keepdims=True))
    pooled = pooled_cols[0] if tb == 1 else jnp.concatenate(pooled_cols, axis=1)

    # Backbone fc + every bias-free head in a single matmul (pre-combined weights).
    comb = jnp.dot(wcombt_ref[...], pooled.astype(compute_dtype),
                   preferred_element_type=jnp.float32) + bcomb_ref[...]  # [COMBP, TB]
    comb_ref[0] = comb


def _fused_forward_call(cols, wconv, bconv, gap_row, wcombt, bcomb, *,
                        tb, hwp, with_pod, pod_dtype, compute_dtype):
    n_blocks, k9p, tbhwp = cols.shape
    coutp = wconv.shape[0]
    combp = wcombt.shape[0]

    kern = functools.partial(_lll_fused_kernel, tb=tb, hwp=hwp,
                             compute_dtype=compute_dtype, with_pod=with_pod)

    in_specs = [
        pl.BlockSpec((1, k9p, tbhwp), lambda i: (i, 0, 0)),
        pl.BlockSpec((coutp, k9p), lambda i: (0, 0)),
        pl.BlockSpec((coutp, 1), lambda i: (0, 0)),
        pl.BlockSpec((1, hwp), lambda i: (0, 0)),
        pl.BlockSpec((combp, coutp), lambda i: (0, 0)),
        pl.BlockSpec((combp, 1), lambda i: (0, 0)),
    ]
    out_specs = [pl.BlockSpec((1, combp, tb), lambda i: (i, 0, 0))]
    out_shapes = [jax.ShapeDtypeStruct((n_blocks, combp, tb), jnp.float32)]
    if with_pod:
        out_specs.append(pl.BlockSpec((1, coutp, tbhwp), lambda i: (i, 0, 0)))
        out_shapes.append(jax.ShapeDtypeStruct((n_blocks, coutp, tbhwp), pod_dtype))

    grid_spec = pltpu.PrefetchScalarGridSpec(
        num_scalar_prefetch=0,
        grid=(n_blocks,),
        in_specs=in_specs,
        out_specs=out_specs,
    )

    return pl.pallas_call(
        kern,
        out_shape=tuple(out_shapes),
        grid_spec=grid_spec,
        compiler_params=pltpu.CompilerParams(
            dimension_semantics=("parallel",)),
    )(cols, wconv, bconv, gap_row, wcombt, bcomb)


# ------------------------------ forward (glue) ----------------------------- #

@functools.partial(jax.jit, static_argnames=("return_features", "compute_dtype"))
def lll_net_forward(x_nchw, params, return_features=False,
                    compute_dtype=jnp.bfloat16):
    """Mirrors LLL_Net.forward: backbone -> every bias-free head."""
    conv_w, conv_b = params["conv_w"], params["conv_b"]
    fc_w, fc_b = params["fc_w"], params["fc_b"]
    heads = params["heads"]
    assert len(heads) > 0, "Cannot access any head"

    N, Cin, H, W = x_nchw.shape
    Cout = conv_w.shape[0]
    out_size = fc_w.shape[0]
    head_sizes = [int(h.shape[0]) for h in heads]
    total_heads = sum(head_sizes)

    HW = H * W
    HWP = _round_up(HW, 128)
    K9 = 9 * Cin
    K9P = _round_up(K9, 8)
    COUTP = _round_up(Cout, 8)
    COMB = out_size + total_heads
    COMBP = _round_up(COMB, 128)

    # Batch blocking: at most two grid steps, capped so per-step VMEM stays small.
    tb = 1 if N <= 1 else min((N + 1) // 2, 64)
    n_blocks = -(-N // tb)
    n_pad = tb * n_blocks

    # Input im2col -> [N, 9*Cin, H*W]; spatial on the lane axis (lane-dense, already in
    # NCHW-flat order so pod_features needs no kernel-side transpose).
    xp = jnp.pad(x_nchw, ((0, 0), (0, 0), (1, 1), (1, 1)))
    cols = jnp.concatenate(
        [xp[:, :, kh:kh + H, kw:kw + W] for kh in range(3) for kw in range(3)], axis=1)
    cols = cols.reshape(N, K9, HW)
    cols = jnp.pad(cols, ((0, n_pad - N), (0, K9P - K9), (0, HWP - HW)))
    # Fold the tb images of each block onto the lane axis: [n_blocks, K9P, tb*HWP].
    cols = cols.reshape(n_blocks, tb, K9P, HWP).transpose(0, 2, 1, 3)
    cols = cols.reshape(n_blocks, K9P, tb * HWP).astype(compute_dtype)

    # Conv weight [Cout, Cin, 3, 3] -> [COUTP, K9P] (tap-major, Cin-minor, like cols).
    wconv = jnp.transpose(conv_w, (0, 2, 3, 1)).reshape(Cout, K9)
    wconv = jnp.pad(wconv, ((0, COUTP - Cout), (0, K9P - K9))).astype(compute_dtype)
    bconv = jnp.pad(conv_b, (0, COUTP - Cout)).reshape(COUTP, 1).astype(jnp.float32)

    # GAP weights: 1/(H*W) on valid lanes, 0 on lane padding.
    gap_row = jnp.where(jnp.arange(HWP) < HW, 1.0 / HW, 0.0)
    gap_row = gap_row.reshape(1, HWP).astype(jnp.float32)

    # Backbone fc and ALL heads fused into one matmul:
    #   features = pooled @ Wfc^T + bfc
    #   head_i   = features @ Wh_i^T  =  pooled @ (Wfc^T Wh^T) + bfc Wh^T
    # pre-combined in f32, stored transposed (channels on the minor axis).
    hi = lax.Precision.HIGHEST
    wfct = fc_w.astype(jnp.float32).T                                        # [Cout, out]
    wh = jnp.concatenate([h.astype(jnp.float32).T for h in heads], axis=1)   # [out, total]
    wcomb = jnp.concatenate([wfct, jnp.dot(wfct, wh, precision=hi)], axis=1)  # [Cout, COMB]
    wcombt = jnp.pad(wcomb.T, ((0, COMBP - COMB), (0, COUTP - Cout))).astype(compute_dtype)
    bcomb = jnp.concatenate(
        [fc_b.astype(jnp.float32), jnp.dot(fc_b.astype(jnp.float32), wh, precision=hi)])
    bcomb = jnp.pad(bcomb, (0, COMBP - COMB)).reshape(COMBP, 1)

    pod_dtype = (jnp.float32 if jnp.dtype(compute_dtype) == jnp.dtype(jnp.float32)
                 else jnp.bfloat16)

    outs = _fused_forward_call(cols, wconv, bconv, gap_row, wcombt, bcomb,
                               tb=tb, hwp=HWP, with_pod=return_features,
                               pod_dtype=pod_dtype, compute_dtype=compute_dtype)

    comb = outs[0].transpose(0, 2, 1).reshape(n_pad, COMBP)[:N]     # [N, COMBP] f32
    features = comb[:, :out_size]
    y = []
    off = out_size
    for sz in head_sizes:          # task_offset semantics: contiguous slices in order
        y.append(comb[:, off:off + sz])
        off += sz

    if return_features:
        pod = outs[1].reshape(n_blocks, COUTP, tb, HWP).transpose(0, 2, 1, 3)
        pod = pod.reshape(n_pad, COUTP, HWP)[:N, :Cout, :HW]
        pod = pod.reshape(N, Cout, H, W).astype(jnp.float32)         # NCHW feature map
        return y, features, [pod]
    return y


# --------------------------- pure-JAX reference ----------------------------- #

def lll_net_reference(x, params):
    hi = lax.Precision.HIGHEST
    conv_out = lax.conv_general_dilated(
        x, params["conv_w"], window_strides=(1, 1), padding=((1, 1), (1, 1)),
        dimension_numbers=("NCHW", "OIHW", "NCHW"), precision=hi)
    feat_map = jnp.maximum(conv_out + params["conv_b"][None, :, None, None], 0.0)
    pooled = feat_map.mean(axis=(2, 3))
    features = jnp.dot(pooled, params["fc_w"].T, precision=hi) + params["fc_b"]
    y = [jnp.dot(features, h.T, precision=hi) for h in params["heads"]]
    return y, features, [feat_map]


# --------------------------------- driver ----------------------------------- #

if __name__ == "__main__":
    key = jax.random.PRNGKey(0)
    k_x, k_cw, k_cb, k_fw, k_fb, k_h0, k_h1 = jax.random.split(key, 7)

    # Small shapes consistent with the module's forward (NCHW images).
    N, Cin, H, W = 2, 4, 16, 16
    Cout = 8
    out_size = 32            # LLL_Net.out_size (backbone head out_features)
    head_sizes = [5, 7]      # two tasks added via add_head (nn.Linear, bias=False)

    x = jax.random.normal(k_x, (N, Cin, H, W), dtype=jnp.float32)
    params = {
        "conv_w": 0.1 * jax.random.normal(k_cw, (Cout, Cin, 3, 3), dtype=jnp.float32),
        "conv_b": 0.1 * jax.random.normal(k_cb, (Cout,), dtype=jnp.float32),
        "fc_w": 0.1 * jax.random.normal(k_fw, (out_size, Cout), dtype=jnp.float32),
        "fc_b": 0.1 * jax.random.normal(k_fb, (out_size,), dtype=jnp.float32),
        "heads": [
            0.1 * jax.random.normal(k_h0, (head_sizes[0], out_size), dtype=jnp.float32),
            0.1 * jax.random.normal(k_h1, (head_sizes[1], out_size), dtype=jnp.float32),
        ],
    }

    # Correctness check: float32 compute path (with pod output) vs pure-JAX reference.
    y32, feat32, pods32 = lll_net_forward(x, params, return_features=True,
                                          compute_dtype=jnp.float32)
    y_ref, feat_ref, pods_ref = lll_net_reference(x, params)
    assert bool(jnp.allclose(feat32, feat_ref, atol=1e-3, rtol=1e-3))
    assert bool(jnp.allclose(pods32[0], pods_ref[0], atol=1e-3, rtol=1e-3))
    for a, b in zip(y32, y_ref):
        assert bool(jnp.allclose(a, b, atol=1e-3, rtol=1e-3))

    # Default fast path (bf16 matmuls, f32 accumulation, NO pod writeback).
    y = lll_net_forward(x, params)
    y = jax.block_until_ready(y)

    assert len(y) == len(head_sizes)
    for out, n_cls in zip(y, head_sizes):
        assert out.shape == (N, n_cls), out.shape
        assert out.dtype == jnp.float32

    print("KERNEL_OK")
</pallas_src>

<mosaic_0001>
module attributes {stable_mosaic.version = 11 : i64} {
  func.func @_lll_fused_kernel(%arg0: i32, %arg1: memref<1x40x256xf32, #tpu.memory_space<vmem>>, %arg2: memref<8x40xf32, #tpu.memory_space<vmem>>, %arg3: memref<8x1xf32, #tpu.memory_space<vmem>>, %arg4: memref<1x256xf32, #tpu.memory_space<vmem>>, %arg5: memref<128x8xf32, #tpu.memory_space<vmem>>, %arg6: memref<128x1xf32, #tpu.memory_space<vmem>>, %arg7: memref<1x128x1xf32, #tpu.memory_space<vmem>>, %arg8: memref<1x8x256xf32, #tpu.memory_space<vmem>>) attributes {dimension_semantics = [#tpu.dimension_semantics<parallel>], iteration_bounds = array<i64: 2>, scalar_prefetch = 0 : i64, scratch_operands = 0 : i64, tpu.core_type = #tpu.core_type<tc>, window_params = [{transform_indices = @transform_0, window_bounds = array<i64: 1, 40, 256>}, {pipeline_mode = #tpu.pipeline_mode<synchronous>, transform_indices = @transform_1, window_bounds = array<i64: 8, 40>}, {pipeline_mode = #tpu.pipeline_mode<synchronous>, transform_indices = @transform_2, window_bounds = array<i64: 8, 1>}, {pipeline_mode = #tpu.pipeline_mode<synchronous>, transform_indices = @transform_3, window_bounds = array<i64: 1, 256>}, {pipeline_mode = #tpu.pipeline_mode<synchronous>, transform_indices = @transform_4, window_bounds = array<i64: 128, 8>}, {pipeline_mode = #tpu.pipeline_mode<synchronous>, transform_indices = @transform_5, window_bounds = array<i64: 128, 1>}, {transform_indices = @transform_6, window_bounds = array<i64: 1, 128, 1>}, {transform_indices = @transform_7, window_bounds = array<i64: 1, 8, 256>}]} {
    %c0 = arith.constant 0 : index
    %c0_0 = arith.constant 0 : index
    %c0_1 = arith.constant 0 : index
    %0 = vector.load %arg1[%c0, %c0_0, %c0_1] : memref<1x40x256xf32, #tpu.memory_space<vmem>>, vector<1x40x256xf32>
    %1 = vector.shape_cast %0 : vector<1x40x256xf32> to vector<40x256xf32>
    %c0_2 = arith.constant 0 : index
    %c0_3 = arith.constant 0 : index
    %2 = vector.load %arg2[%c0_2, %c0_3] : memref<8x40xf32, #tpu.memory_space<vmem>>, vector<8x40xf32>
    %cst = arith.constant dense<0.000000e+00> : vector<8x256xf32>
    %3 = tpu.matmul %2, %1, %cst {dimension_numbers = #tpu.dot_dimension_numbers<[1], [0], [0], [1], [0, 0, 1, 1], [], []>} : vector<8x40xf32>, vector<40x256xf32>, vector<8x256xf32> -> vector<8x256xf32>
    %c0_4 = arith.constant 0 : index
    %c0_5 = arith.constant 0 : index
    %4 = vector.load %arg3[%c0_4, %c0_5] : memref<8x1xf32, #tpu.memory_space<vmem>>, vector<8x1xf32>
    %5 = vector.broadcast %4 : vector<8x1xf32> to vector<8x256xf32>
    %6 = arith.addf %3, %5 : vector<8x256xf32>
    %cst_6 = arith.constant 0.000000e+00 : f32
    %7 = vector.broadcast %cst_6 : f32 to vector<8x256xf32>
    %8 = arith.maximumf %6, %7 : vector<8x256xf32>
    %c0_7 = arith.constant 0 : index
    %c0_8 = arith.constant 0 : index
    %c0_9 = arith.constant 0 : index
    %9 = vector.load %arg8[%c0_7, %c0_8, %c0_9] : memref<1x8x256xf32, #tpu.memory_space<vmem>>, vector<1x8x256xf32>
    %10 = vector.shape_cast %9 : vector<1x8x256xf32> to vector<8x256xf32>
    %11 = vector.shape_cast %8 : vector<8x256xf32> to vector<1x8x256xf32>
    tpu.vector_store %arg8[%c0_7, %c0_8, %c0_9], %11 {strides = array<i32>} : memref<1x8x256xf32, #tpu.memory_space<vmem>>, vector<1x8x256xf32>,
    %c0_10 = arith.constant 0 : index
    %c0_11 = arith.constant 0 : index
    %12 = vector.load %arg4[%c0_10, %c0_11] : memref<1x256xf32, #tpu.memory_space<vmem>>, vector<1x256xf32>
    %13 = vector.broadcast %12 : vector<1x256xf32> to vector<8x256xf32>
    %14 = arith.mulf %8, %13 : vector<8x256xf32>
    %cst_12 = arith.constant dense<0.000000e+00> : vector<8xf32>
    %15 = vector.multi_reduction <add>, %14, %cst_12 [1] : vector<8x256xf32> to vector<8xf32>
    %16 = vector.shape_cast %15 : vector<8xf32> to vector<8x1xf32>
    %c0_13 = arith.constant 0 : index
    %c0_14 = arith.constant 0 : index
    %17 = vector.load %arg5[%c0_13, %c0_14] : memref<128x8xf32, #tpu.memory_space<vmem>>, vector<128x8xf32>
    %cst_15 = arith.constant dense<0.000000e+00> : vector<128x1xf32>
    %18 = tpu.matmul %17, %16, %cst_15 {dimension_numbers = #tpu.dot_dimension_numbers<[1], [0], [0], [1], [0, 0, 1, 1], [], []>} : vector<128x8xf32>, vector<8x1xf32>, vector<128x1xf32> -> vector<128x1xf32>
    %c0_16 = arith.constant 0 : index
    %c0_17 = arith.constant 0 : index
    %19 = vector.load %arg6[%c0_16, %c0_17] : memref<128x1xf32, #tpu.memory_space<vmem>>, vector<128x1xf32>
    %20 = arith.addf %18, %19 : vector<128x1xf32>
    %c0_18 = arith.constant 0 : index
    %c0_19 = arith.constant 0 : index
    %c0_20 = arith.constant 0 : index
    %21 = vector.load %arg7[%c0_18, %c0_19, %c0_20] : memref<1x128x1xf32, #tpu.memory_space<vmem>>, vector<1x128x1xf32>
    %22 = vector.shape_cast %21 : vector<1x128x1xf32> to vector<128x1xf32>
    %23 = vector.shape_cast %20 : vector<128x1xf32> to vector<1x128x1xf32>
    tpu.vector_store %arg7[%c0_18, %c0_19, %c0_20], %23 {strides = array<i32>} : memref<1x128x1xf32, #tpu.memory_space<vmem>>, vector<1x128x1xf32>,
    return
  }
  func.func @transform_0(%arg0: i32) -> (i32, i32, i32) {
    %c0_i32 = arith.constant 0 : i32
    %c0_i32_0 = arith.constant 0 : i32
    %c0_i32_1 = arith.constant 0 : i32
    return %arg0, %c0_i32, %c0_i32_0 : i32, i32, i32
  }
  func.func @transform_1(%arg0: i32) -> (i32, i32) {
    %c0_i32 = arith.constant 0 : i32
    %c0_i32_0 = arith.constant 0 : i32
    %c0_i32_1 = arith.constant 0 : i32
    return %c0_i32, %c0_i32_0 : i32, i32
  }
  func.func @transform_2(%arg0: i32) -> (i32, i32) {
    %c0_i32 = arith.constant 0 : i32
    %c0_i32_0 = arith.constant 0 : i32
    %c0_i32_1 = arith.constant 0 : i32
    return %c0_i32, %c0_i32_0 : i32, i32
  }
  func.func @transform_3(%arg0: i32) -> (i32, i32) {
    %c0_i32 = arith.constant 0 : i32
    %c0_i32_0 = arith.constant 0 : i32
    %c0_i32_1 = arith.constant 0 : i32
    return %c0_i32, %c0_i32_0 : i32, i32
  }
  func.func @transform_4(%arg0: i32) -> (i32, i32) {
    %c0_i32 = arith.constant 0 : i32
    %c0_i32_0 = arith.constant 0 : i32
    %c0_i32_1 = arith.constant 0 : i32
    return %c0_i32, %c0_i32_0 : i32, i32
  }
  func.func @transform_5(%arg0: i32) -> (i32, i32) {
    %c0_i32 = arith.constant 0 : i32
    %c0_i32_0 = arith.constant 0 : i32
    %c0_i32_1 = arith.constant 0 : i32
    return %c0_i32, %c0_i32_0 : i32, i32
  }
  func.func @transform_6(%arg0: i32) -> (i32, i32, i32) {
    %c0_i32 = arith.constant 0 : i32
    %c0_i32_0 = arith.constant 0 : i32
    %c0_i32_1 = arith.constant 0 : i32
    return %arg0, %c0_i32, %c0_i32_0 : i32, i32, i32
  }
  func.func @transform_7(%arg0: i32) -> (i32, i32, i32) {
    %c0_i32 = arith.constant 0 : i32
    %c0_i32_0 = arith.constant 0 : i32
    %c0_i32_1 = arith.constant 0 : i32
    return %arg0, %c0_i32, %c0_i32_0 : i32, i32, i32
  }
}

</mosaic_0001>

<llo_original>
// kernel: lll_net_forward.1
$region0: #{lll_net_forward.1}
  #allocation0 [shape = 'u32[]', space=smem, size = 0x4, offset = 0x4, fixed_abs, tag = 'smem constant byte address 0x4 - core index']
  #allocation1 [shape = 'u32[144,128]{1,0:T(1,128)}', space=vmem, size = 0x12000, scoped, tag = 'internal scratch']
  %s0 = inlined_call_operand.vmem [shape: f32[2,40,256], index: 0, kind: input, shape index: {}]
  %s1 = inlined_call_operand.vmem [shape: f32[8,40], index: 1, kind: input, shape index: {}]
  %s2 = inlined_call_operand.vmem [shape: f32[8,1], index: 2, kind: input, shape index: {}]
  %s3 = inlined_call_operand.vmem [shape: f32[1,256], index: 3, kind: input, shape index: {}]
  %s4 = inlined_call_operand.vmem [shape: f32[128,8], index: 4, kind: input, shape index: {}]
  %s5 = inlined_call_operand.vmem [shape: f32[128,1], index: 5, kind: input, shape index: {}]
  %s6 = inlined_call_operand.vmem [shape: f32[2,128,1], index: 6, kind: output, shape index: {0}]
  %s7 = inlined_call_operand.vmem [shape: f32[2,8,256], index: 7, kind: output, shape index: {1}]
  %8 = xla_tuple %s6, %s7
  %s9 = sld [smem:[#allocation0]]
  $region65: #{lll_net_forward.1} parent=0
    _
  %s11 = ssub.s32 1, %s9
  %s12 = scalar_select 0, %s11, %s9
  loop: start=0, step=1, limit=4
  $region2: #{lll_net_forward.1} parent=0 // loop_pre_header
    _
  $region3: #{lll_net_forward.1} parent=0 // loop_header
    %s14 = sphi 0, %s18
    %p15 = scmp.ge.s32.totalorder %s14, 4
    %s24 = sphi 0, %s26
    %s27 = sphi 0, %s24
    %s28 = sphi 0, %s27
    %s44 = sphi 0, %s28
    %s48 = sphi 0, %s48
    %s50 = sphi 0, %s48
    %s51 = sphi 0, %s50
    %s65 = sphi 0, %s51
    %s69 = sphi 0, %s69
    %s71 = sphi 0, %s69
    %s72 = sphi 0, %s71
    %s86 = sphi 0, %s72
    %s90 = sphi 0, %s90
    %s92 = sphi 0, %s90
    %s93 = sphi 0, %s92
    %s107 = sphi 0, %s93
    %s111 = sphi 0, %s111
    %s113 = sphi 0, %s111
    %s114 = sphi 0, %s113
    %s128 = sphi 0, %s114
    %s132 = sphi 0, %s132
    %s134 = sphi 0, %s132
    %s135 = sphi 0, %s134
    %s149 = sphi 0, %s135
    %s155 = sphi 0, %s157
    %s158 = sphi 0, %s155
    %s159 = sphi 0, %s158
    %s175 = sphi 0, %s159
    %s181 = sphi 0, %s183
    %s184 = sphi 0, %s181
    %s185 = sphi 0, %s184
    %s201 = sphi 0, %s185
  $region4: #{lll_net_forward.1} parent=0 // loop_header_branch
    %17 = sbr.rel (%p15) target = $region8
  $region5: #{lll_net_forward.1} parent=0 // loop_body
    %s19 = ssub.s32 %s14, 1
    %s20 = ssub.s32 %s14, 2
    %s21 = sadd.s32 %s14, 1
    %s22 = ssub.s32 %s14, %s21
    %p23 = scmp.eq.s32.totalorder %s22, 0
    %s25 = sadd.s32 %s24, 1
    %s26 = scalar_select %p23, %s24, %s25
    %p29 = pneg %p23
    %p30 = scmp.eq.s32.totalorder %s14, 1
    %p31 = por %p29, %p30
    %p32 = scmp.ne.s32.totalorder %s24, %s27
    %p33 = scmp.eq.s32.totalorder %s14, 0
    %p34 = por %p32, %p33
    %p35 = scmp.ne.s32.totalorder %s24, %s27
    %p36 = scmp.eq.s32.totalorder %s19, 1
    %p37 = por %p35, %p36
    %p38 = scmp.ne.s32.totalorder %s27, %s28
    %p39 = scmp.eq.s32.totalorder %s19, 0
    %p40 = por %p38, %p39
    %p41 = scmp.ne.s32.totalorder %s27, %s28
    %p42 = scmp.eq.s32.totalorder %s20, 1
    %p43 = por %p41, %p42
    %p45 = scmp.ne.s32.totalorder %s28, %s44
    %p46 = scmp.eq.s32.totalorder %s20, 0
    %p47 = por %p45, %p46
    %s49 = sadd.s32 %s48, 1
    %p52 = scmp.eq.s32.totalorder %s14, 1
    %p53 = scmp.ne.s32.totalorder %s48, %s50
    %p54 = scmp.eq.s32.totalorder %s14, 0
    %p55 = por %p53, %p54
    %p56 = scmp.ne.s32.totalorder %s48, %s50
    %p57 = scmp.eq.s32.totalorder %s19, 1
    %p58 = por %p56, %p57
    %p59 = scmp.ne.s32.totalorder %s50, %s51
    %p60 = scmp.eq.s32.totalorder %s19, 0
    %p61 = por %p59, %p60
    %p62 = scmp.ne.s32.totalorder %s50, %s51
    %p63 = scmp.eq.s32.totalorder %s20, 1
    %p64 = por %p62, %p63
    %p66 = scmp.ne.s32.totalorder %s51, %s65
    %p67 = scmp.eq.s32.totalorder %s20, 0
    %p68 = por %p66, %p67
    %s70 = sadd.s32 %s69, 1
    %p73 = scmp.eq.s32.totalorder %s14, 1
    %p74 = scmp.ne.s32.totalorder %s69, %s71
    %p75 = scmp.eq.s32.totalorder %s14, 0
    %p76 = por %p74, %p75
    %p77 = scmp.ne.s32.totalorder %s69, %s71
    %p78 = scmp.eq.s32.totalorder %s19, 1
    %p79 = por %p77, %p78
    %p80 = scmp.ne.s32.totalorder %s71, %s72
    %p81 = scmp.eq.s32.totalorder %s19, 0
    %p82 = por %p80, %p81
    %p83 = scmp.ne.s32.totalorder %s71, %s72
    %p84 = scmp.eq.s32.totalorder %s20, 1
    %p85 = por %p83, %p84
    %p87 = scmp.ne.s32.totalorder %s72, %s86
    %p88 = scmp.eq.s32.totalorder %s20, 0
    %p89 = por %p87, %p88
    %s91 = sadd.s32 %s90, 1
    %p94 = scmp.eq.s32.totalorder %s14, 1
    %p95 = scmp.ne.s32.totalorder %s90, %s92
    %p96 = scmp.eq.s32.totalorder %s14, 0
    %p97 = por %p95, %p96
    %p98 = scmp.ne.s32.totalorder %s90, %s92
    %p99 = scmp.eq.s32.totalorder %s19, 1
    %p100 = por %p98, %p99
    %p101 = scmp.ne.s32.totalorder %s92, %s93
    %p102 = scmp.eq.s32.totalorder %s19, 0
    %p103 = por %p101, %p102
    %p104 = scmp.ne.s32.totalorder %s92, %s93
    %p105 = scmp.eq.s32.totalorder %s20, 1
    %p106 = por %p104, %p105
    %p108 = scmp.ne.s32.totalorder %s93, %s107
    %p109 = scmp.eq.s32.totalorder %s20, 0
    %p110 = por %p108, %p109
    %s112 = sadd.s32 %s111, 1
    %p115 = scmp.eq.s32.totalorder %s14, 1
    %p116 = scmp.ne.s32.totalorder %s111, %s113
    %p117 = scmp.eq.s32.totalorder %s14, 0
    %p118 = por %p116, %p117
    %p119 = scmp.ne.s32.totalorder %s111, %s113
    %p120 = scmp.eq.s32.totalorder %s19, 1
    %p121 = por %p119, %p120
    %p122 = scmp.ne.s32.totalorder %s113, %s114
    %p123 = scmp.eq.s32.totalorder %s19, 0
    %p124 = por %p122, %p123
    %p125 = scmp.ne.s32.totalorder %s113, %s114
    %p126 = scmp.eq.s32.totalorder %s20, 1
    %p127 = por %p125, %p126
    %p129 = scmp.ne.s32.totalorder %s114, %s128
    %p130 = scmp.eq.s32.totalorder %s20, 0
    %p131 = por %p129, %p130
    %s133 = sadd.s32 %s132, 1
    %p136 = scmp.eq.s32.totalorder %s14, 1
    %p137 = scmp.ne.s32.totalorder %s132, %s134
    %p138 = scmp.eq.s32.totalorder %s14, 0
    %p139 = por %p137, %p138
    %p140 = scmp.ne.s32.totalorder %s132, %s134
    %p141 = scmp.eq.s32.totalorder %s19, 1
    %p142 = por %p140, %p141
    %p143 = scmp.ne.s32.totalorder %s134, %s135
    %p144 = scmp.eq.s32.totalorder %s19, 0
    %p145 = por %p143, %p144
    %p146 = scmp.ne.s32.totalorder %s134, %s135
    %p147 = scmp.eq.s32.totalorder %s20, 1
    %p148 = por %p146, %p147
    %p150 = scmp.ne.s32.totalorder %s135, %s149
    %p151 = scmp.eq.s32.totalorder %s20, 0
    %p152 = por %p150, %p151
    %s153 = ssub.s32 %s14, %s21
    %p154 = scmp.eq.s32.totalorder %s153, 0
    %s156 = sadd.s32 %s155, 1
    %s157 = scalar_select %p154, %s155, %s156
    %p160 = pneg %p154
    %p161 = scmp.eq.s32.totalorder %s14, 1
    %p162 = por %p160, %p161
    %p163 = scmp.ne.s32.totalorder %s155, %s158
    %p164 = scmp.eq.s32.totalorder %s14, 0
    %p165 = por %p163, %p164
    %p166 = scmp.ne.s32.totalorder %s155, %s158
    %p167 = scmp.eq.s32.totalorder %s19, 1
    %p168 = por %p166, %p167
    %p169 = scmp.ne.s32.totalorder %s158, %s159
    %p170 = scmp.eq.s32.totalorder %s19, 0
    %p171 = por %p169, %p170
    %p172 = scmp.ne.s32.totalorder %s158, %s159
    %p173 = scmp.eq.s32.totalorder %s20, 1
    %p174 = por %p172, %p173
    %p176 = scmp.ne.s32.totalorder %s159, %s175
    %p177 = scmp.eq.s32.totalorder %s20, 0
    %p178 = por %p176, %p177
    %s179 = ssub.s32 %s14, %s21
    %p180 = scmp.eq.s32.totalorder %s179, 0
    %s182 = sadd.s32 %s181, 1
    %s183 = scalar_select %p180, %s181, %s182
    %p186 = pneg %p180
    %p187 = scmp.eq.s32.totalorder %s14, 1
    %p188 = por %p186, %p187
    %p189 = scmp.ne.s32.totalorder %s181, %s184
    %p190 = scmp.eq.s32.totalorder %s14, 0
    %p191 = por %p189, %p190
    %p192 = scmp.ne.s32.totalorder %s181, %s184
    %p193 = scmp.eq.s32.totalorder %s19, 1
    %p194 = por %p192, %p193
    %p195 = scmp.ne.s32.totalorder %s184, %s185
    %p196 = scmp.eq.s32.totalorder %s19, 0
    %p197 = por %p195, %p196
    %p198 = scmp.ne.s32.totalorder %s184, %s185
    %p199 = scmp.eq.s32.totalorder %s20, 1
    %p200 = por %p198, %p199
    %p202 = scmp.ne.s32.totalorder %s185, %s201
    %p203 = scmp.eq.s32.totalorder %s20, 0
    %p204 = por %p202, %p203
    %p205 = scmp.le.s32.totalorder 1, %s14
    %p206 = scmp.lt.s32.totalorder %s14, 3
    %p207 = pnand %p205, %p206
    %p208 = pneg %p207
    // Predicated region
    $region9: #{lll_net_forward.1} parent=5 // pred_check
      _
    $region10: #{lll_net_forward.1} parent=5 // pred_check_branch
      %210 = sbr.rel (%p207) target = $region12
    $region11: #{lll_net_forward.1} parent=5 // pred_region
      %s211 = ssub.s32 %s14, 1
      // Predicated region
      $region13: #{lll_net_forward.1} parent=11 // pred_check
        %p212 = pneg %p61
      $region14: #{lll_net_forward.1} parent=11 // pred_check_branch
        %214 = sbr.rel (%p212) target = $region16
      $region15: #{lll_net_forward.1} parent=11 // pred_region
        _
      $region16: #{lll_net_forward.1} parent=11 // pred_fallthru
        _
      // Predicated region
      $region17: #{lll_net_forward.1} parent=11 // pred_check
        %p215 = pneg %p82
      $region18: #{lll_net_forward.1} parent=11 // pred_check_branch
        %217 = sbr.rel (%p215) target = $region20
      $region19: #{lll_net_forward.1} parent=11 // pred_region
        _
      $region20: #{lll_net_forward.1} parent=11 // pred_fallthru
        _
      // Predicated region
      $region21: #{lll_net_forward.1} parent=11 // pred_check
        %p218 = pneg %p103
      $region22: #{lll_net_forward.1} parent=11 // pred_check_branch
        %220 = sbr.rel (%p218) target = $region24
      $region23: #{lll_net_forward.1} parent=11 // pred_region
        _
      $region24: #{lll_net_forward.1} parent=11 // pred_fallthru
        _
      // Predicated region
      $region25: #{lll_net_forward.1} parent=11 // pred_check
        %p221 = pneg %p124
      $region26: #{lll_net_forward.1} parent=11 // pred_check_branch
        %223 = sbr.rel (%p221) target = $region28
      $region27: #{lll_net_forward.1} parent=11 // pred_region
        _
      $region28: #{lll_net_forward.1} parent=11 // pred_fallthru
        _
      // Predicated region
      $region29: #{lll_net_forward.1} parent=11 // pred_check
        %p224 = pneg %p145
      $region30: #{lll_net_forward.1} parent=11 // pred_check_branch
        %226 = sbr.rel (%p224) target = $region32
      $region31: #{lll_net_forward.1} parent=11 // pred_region
        _
      $region32: #{lll_net_forward.1} parent=11 // pred_fallthru
        _
    $region12: #{lll_net_forward.1} parent=5 // pred_fallthru
      _
    %p227 = scmp.lt.s32.totalorder %s14, 2
    // Predicated region
    $region33: #{lll_net_forward.1} parent=5 // pred_check
      %p228 = pneg %p227
    $region34: #{lll_net_forward.1} parent=5 // pred_check_branch
      %230 = sbr.rel (%p228) target = $region36
    $region35: #{lll_net_forward.1} parent=5 // pred_region
      // Predicated region
      $region37: #{lll_net_forward.1} parent=35 // pred_check
        %p231 = pneg %p34
      $region38: #{lll_net_forward.1} parent=35 // pred_check_branch
        %233 = sbr.rel (%p231) target = $region40
      $region39: #{lll_net_forward.1} parent=35 // pred_region
        %p234 = scmp.lt.s32.totalorder %s14, 1
        %s235 = scalar_select %p234, %s14, 1
        %s236 = smul.addr %s235, 10
        %s237 = smul.addr %s236, 8
        %s238 = scalar_lea.vmem %s0, %s237
      $region40: #{lll_net_forward.1} parent=35 // pred_fallthru
        _
    $region36: #{lll_net_forward.1} parent=5 // pred_fallthru
      _
    %p239 = scmp.le.s32.totalorder 1, %s14
    %p240 = scmp.lt.s32.totalorder %s14, 3
    %p241 = pnand %p239, %p240
    %p242 = pneg %p241
    // Predicated region
    $region41: #{lll_net_forward.1} parent=5 // pred_check
      _
    $region42: #{lll_net_forward.1} parent=5 // pred_check_branch
      %244 = sbr.rel (%p241) target = $region44
    $region43: #{lll_net_forward.1} parent=5 // pred_region
      %s245 = ssub.s32 %s14, 1
      %p246 = scmp.lt.s32.totalorder %s19, 1
      %s247 = scalar_select %p246, %s19, 1
      %s248 = smul.addr %s247, 10
      %s249 = smul.addr %s248, 8
      %s250 = scalar_lea.vmem %s0, %s249
      %p251 = pneg %p40
      %p252 = pneg %p37
      %p253 = pneg %p61
      %p254 = pneg %p58
      %p255 = pneg %p82
      %p256 = pneg %p79
      %p257 = pneg %p103
      %p258 = pneg %p100
      %p259 = pneg %p124
      %p260 = pneg %p121
      %p261 = pneg %p145
      %p262 = pneg %p142
      %p263 = pneg %p171
      %p264 = pneg %p168
      %p265 = scmp.lt.s32.totalorder %s19, 1
      %s266 = scalar_select %p265, %s19, 1
      %s267 = smul.addr %s266, 16
      %s268 = smul.addr %s267, 8
      %s269 = scalar_lea.vmem %s6, %s268
      %p270 = pneg %p197
      %p271 = pneg %p194
      %p272 = scmp.lt.s32.totalorder %s19, 1
      %s273 = scalar_select %p272, %s19, 1
      %s274 = smul.addr %s273, 2
      %s275 = smul.addr %s274, 8
      %s276 = scalar_lea.vmem %s7, %s275
      %p277 = scmp.lt.s32.totalorder %s19, 1
      %s278 = scalar_select %p277, %s19, 1
      %s279 = smul.addr %s278, 10
      %s280 = smul.addr %s279, 8
      %s281 = scalar_lea.vmem %s0, %s280
      %p282 = scmp.lt.s32.totalorder %s19, 1
      %s283 = scalar_select %p282, %s19, 1
      %s284 = smul.addr %s283, 16
      %s285 = smul.addr %s284, 8
      %s286 = scalar_lea.vmem %s6, %s285
      %p287 = scmp.lt.s32.totalorder %s19, 1
      %s288 = scalar_select %p287, %s19, 1
      %s289 = smul.addr %s288, 2
      %s290 = smul.addr %s289, 8
      %s291 = scalar_lea.vmem %s7, %s290
      %v292 = vld [vmem:[%s281] sm:$0xff]
      %v293 = vld [vmem:[%s281 + $0x8] sm:$0xff]
      %v294 = vld [vmem:[%s281 + $0x10] sm:$0xff]
      %v295 = vld [vmem:[%s281 + $0x18] sm:$0xff]
      %v296 = vld [vmem:[%s281 + $0x20] sm:$0xff]
      %v297 = vld [vmem:[%s281 + $0x28] sm:$0xff]
      %v298 = vld [vmem:[%s281 + $0x30] sm:$0xff]
      %v299 = vld [vmem:[%s281 + $0x38] sm:$0xff]
      %v300 = vld [vmem:[%s281 + $0x40] sm:$0xff]
      %v301 = vld [vmem:[%s281 + $0x48] sm:$0xff]
      %v302 = vld [vmem:[%s1] sm:$0xff]
      %v303 = vld [vmem:[%s2] sm:$0xff]
      %305 = vset.pattern.permute.xlu0 0
      %306 = vperm.xlu0 %305, %v303
      %v307 = vpop.permute.xlu0 %306
      %vm309 = vcmask 326656
      %v311 = vsel %vm309, %v302, 0
      %313 = vmatprep.subr.mxu0 %v293
      %314 = vmatpush1.msra.mxu0 %v292
      %315 = vmatprep.subr.mxu0 %v295
      %316 = vmatpush1.msra.mxu0 %v294
      %317 = vmatprep.subr.mxu0 %v297
      %318 = vmatpush1.msra.mxu0 %v296
      %319 = vmatprep.subr.mxu0 %v299
      %320 = vmatpush1.msra.mxu0 %v298
      %321 = vmatprep.subr.mxu0 %v301
      %322 = vmatpush1.msra.mxu0 %v300
      %323 = vmatprep.subr.mxu0 0.0
      %324 = vmatpush1.msra.mxu0 0.0
      %325 = vmatprep.subr.mxu0 0.0
      %326 = vmatpush1.msra.mxu0 0.0
      %327 = vmatprep.subr.mxu0 0.0
      %328 = vmatpush1.msra.mxu0 0.0
      %329 = vmatprep.subr.mxu0 0.0
      %330 = vmatpush1.msra.mxu0 0.0
      %331 = vmatprep.subr.mxu0 0.0
      %332 = vmatpush1.msra.mxu0 0.0
      %333 = vmatprep.subr.mxu0 0.0
      %334 = vmatpush1.msra.mxu0 0.0
      %335 = vmatprep.subr.mxu0 0.0
      %336 = vmatpush1.msra.mxu0 0.0
      %337 = vmatprep.subr.mxu0 0.0
      %338 = vmatpush1.msra.mxu0 0.0
      %339 = vmatprep.subr.mxu0 0.0
      %340 = vmatpush1.msra.mxu0 0.0
      %341 = vmatprep.subr.mxu0 0.0
      %342 = vmatpush1.msra.mxu0 0.0
      %343 = vmatprep.subr.mxu0 0.0
      %344 = vmatpush1.msra.mxu0 0.0
      %345 = vmatprep.subr.mxu0 0.0
      %346 = vmatpush1.msra.mxu0 0.0
      %347 = vmatprep.subr.mxu0 0.0
      %348 = vmatpush1.msra.mxu0 0.0
      %349 = vmatprep.subr.mxu0 0.0
      %350 = vmatpush1.msra.mxu0 0.0
      %351 = vmatprep.subr.mxu0 0.0
      %352 = vmatpush1.msra.mxu0 0.0
      %353 = vmatprep.subr.mxu0 0.0
      %354 = vmatpush1.msra.mxu0 0.0
      %355 = vmatprep.subr.mxu0 0.0
      %356 = vmatpush1.msra.mxu0 0.0
      %357 = vmatprep.subr.mxu0 0.0
      %358 = vmatpush1.msra.mxu0 0.0
      %359 = vmatprep.subr.mxu0 0.0
      %360 = vmatpush1.msra.mxu0 0.0
      %361 = vmatprep.subr.mxu0 0.0
      %362 = vmatpush1.msra.mxu0 0.0
      %363 = vmatprep.subr.mxu0 0.0
      %364 = vmatpush1.msra.mxu0 0.0
      %365 = vmatprep.subr.mxu0 0.0
      %366 = vmatpush1.msra.mxu0 0.0
      %367 = vmatprep.subr.mxu0 0.0
      %368 = vmatpush1.msra.mxu0 0.0
      %369 = vmatprep.subr.mxu0 0.0
      %370 = vmatpush1.msra.mxu0 0.0
      %371 = vmatprep.subr.mxu0 0.0
      %372 = vmatpush1.msra.mxu0 0.0
      %373 = vmatprep.subr.mxu0 0.0
      %374 = vmatpush1.msra.mxu0 0.0
      %375 = vmatprep.subr.mxu0 0.0
      %376 = vmatpush1.msra.mxu0 0.0
      %377 = vmatprep.mubr.f32.mxu0 0.0
      %378 = vmatmul.mubr.f32.gmra.mrb[0].mxu0 %v311
      %v379 = vpop.f32.mrb[0].mxu0
      %v380 = vadd.f32 %v307, %v379
      %v381 = vpop.f32.mrb[0].mxu0
      %v382 = vadd.f32 %v307, %v381
      %383 = vdwg.mxu0
      %v384 = vmax.f32 %v380, 0.0
      %v385 = vmax.f32 %v382, 0.0
      %386 = vst [vmem:[%s291] sm:$0xff] %v384
      %387 = vst [vmem:[%s291 + $0x8] sm:$0xff] %v385
      %v388 = vld [vmem:[%s3] sm:$0x3]
      %v390 = vlaneseq
      %v391 = vshrl.u32 %v390, 7
      %v392 = vsub.s32 0, %v391
      %v393 = vrot.slane %v388, %v392
      %v394 = vlaneseq
      %v395 = vshrl.u32 %v394, 7
      %v396 = vsub.s32 1, %v395
      %v397 = vrot.slane %v388, %v396
      %v400 = vmul.f32 %v384, %v393
      %v401 = vmul.f32 %v385, %v397
      %v402 = vadd.f32 %v400, %v401
      %403 = vadd.xlane.f32.xlu0 %v402
      %v404 = vpop.xlane.xlu0 %403
      %v405 = vld [vmem:[%s4] sm:$0xff]
      %v406 = vld [vmem:[%s4 + $0x8] sm:$0xff]
      %v407 = vld [vmem:[%s4 + $0x10] sm:$0xff]
      %v408 = vld [vmem:[%s4 + $0x18] sm:$0xff]
      %v409 = vld [vmem:[%s4 + $0x20] sm:$0xff]
      %v410 = vld [vmem:[%s4 + $0x28] sm:$0xff]
      %v411 = vld [vmem:[%s4 + $0x30] sm:$0xff]
      %v412 = vld [vmem:[%s4 + $0x38] sm:$0xff]
      %v413 = vld [vmem:[%s4 + $0x40] sm:$0xff]
      %v414 = vld [vmem:[%s4 + $0x48] sm:$0xff]
      %v415 = vld [vmem:[%s4 + $0x50] sm:$0xff]
      %v416 = vld [vmem:[%s4 + $0x58] sm:$0xff]
      %v417 = vld [vmem:[%s4 + $0x60] sm:$0xff]
      %v418 = vld [vmem:[%s4 + $0x68] sm:$0xff]
      %v419 = vld [vmem:[%s4 + $0x70] sm:$0xff]
      %v420 = vld [vmem:[%s4 + $0x78] sm:$0xff]
      %v421 = vld [vmem:[%s5] sm:$0xff]
      %v422 = vld [vmem:[%s5 + $0x8] sm:$0xff]
      %v423 = vld [vmem:[%s5 + $0x10] sm:$0xff]
      %v424 = vld [vmem:[%s5 + $0x18] sm:$0xff]
      %v425 = vld [vmem:[%s5 + $0x20] sm:$0xff]
      %v426 = vld [vmem:[%s5 + $0x28] sm:$0xff]
      %v427 = vld [vmem:[%s5 + $0x30] sm:$0xff]
      %v428 = vld [vmem:[%s5 + $0x38] sm:$0xff]
      %v429 = vld [vmem:[%s5 + $0x40] sm:$0xff]
      %v430 = vld [vmem:[%s5 + $0x48] sm:$0xff]
      %v431 = vld [vmem:[%s5 + $0x50] sm:$0xff]
      %v432 = vld [vmem:[%s5 + $0x58] sm:$0xff]
      %v433 = vld [vmem:[%s5 + $0x60] sm:$0xff]
      %v434 = vld [vmem:[%s5 + $0x68] sm:$0xff]
      %v435 = vld [vmem:[%s5 + $0x70] sm:$0xff]
      %v436 = vld [vmem:[%s5 + $0x78] sm:$0xff]
      %vm437 = vcmask 64512
      %v439 = vsel %vm437, %v405, 0
      %v442 = vsel %vm437, %v406, 0
      %v445 = vsel %vm437, %v407, 0
      %v448 = vsel %vm437, %v408, 0
      %v451 = vsel %vm437, %v409, 0
      %v454 = vsel %vm437, %v410, 0
      %v457 = vsel %vm437, %v411, 0
      %v460 = vsel %vm437, %v412, 0
      %v463 = vsel %vm437, %v413, 0
      %v466 = vsel %vm437, %v414, 0
      %v469 = vsel %vm437, %v415, 0
      %v472 = vsel %vm437, %v416, 0
      %v475 = vsel %vm437, %v417, 0
      %v478 = vsel %vm437, %v418, 0
      %v481 = vsel %vm437, %v419, 0
      %v484 = vsel %vm437, %v420, 0
      %486 = vmatprep.subr.mxu0 0.0
      %487 = vmatpush1.msra.mxu0 %v404
      %488 = vmatprep.subr.mxu0 0.0
      %489 = vmatpush1.msra.mxu0 0.0
      %490 = vmatprep.subr.mxu0 0.0
      %491 = vmatpush1.msra.mxu0 0.0
      %492 = vmatprep.subr.mxu0 0.0
      %493 = vmatpush1.msra.mxu0 0.0
      %494 = vmatprep.subr.mxu0 0.0
      %495 = vmatpush1.msra.mxu0 0.0
      %496 = vmatprep.subr.mxu0 0.0
      %497 = vmatpush1.msra.mxu0 0.0
      %498 = vmatprep.subr.mxu0 0.0
      %499 = vmatpush1.msra.mxu0 0.0
      %500 = vmatprep.subr.mxu0 0.0
      %501 = vmatpush1.msra.mxu0 0.0
      %502 = vmatprep.subr.mxu0 0.0
      %503 = vmatpush1.msra.mxu0 0.0
      %504 = vmatprep.subr.mxu0 0.0
      %505 = vmatpush1.msra.mxu0 0.0
      %506 = vmatprep.subr.mxu0 0.0
      %507 = vmatpush1.msra.mxu0 0.0
      %508 = vmatprep.subr.mxu0 0.0
      %509 = vmatpush1.msra.mxu0 0.0
      %510 = vmatprep.subr.mxu0 0.0
      %511 = vmatpush1.msra.mxu0 0.0
      %512 = vmatprep.subr.mxu0 0.0
      %513 = vmatpush1.msra.mxu0 0.0
      %514 = vmatprep.subr.mxu0 0.0
      %515 = vmatpush1.msra.mxu0 0.0
      %516 = vmatprep.subr.mxu0 0.0
      %517 = vmatpush1.msra.mxu0 0.0
      %518 = vmatprep.subr.mxu0 0.0
      %519 = vmatpush1.msra.mxu0 0.0
      %520 = vmatprep.subr.mxu0 0.0
      %521 = vmatpush1.msra.mxu0 0.0
      %522 = vmatprep.subr.mxu0 0.0
      %523 = vmatpush1.msra.mxu0 0.0
      %524 = vmatprep.subr.mxu0 0.0
      %525 = vmatpush1.msra.mxu0 0.0
      %526 = vmatprep.subr.mxu0 0.0
      %527 = vmatpush1.msra.mxu0 0.0
      %528 = vmatprep.subr.mxu0 0.0
      %529 = vmatpush1.msra.mxu0 0.0
      %530 = vmatprep.subr.mxu0 0.0
      %531 = vmatpush1.msra.mxu0 0.0
      %532 = vmatprep.subr.mxu0 0.0
      %533 = vmatpush1.msra.mxu0 0.0
      %534 = vmatprep.subr.mxu0 0.0
      %535 = vmatpush1.msra.mxu0 0.0
      %536 = vmatprep.subr.mxu0 0.0
      %537 = vmatpush1.msra.mxu0 0.0
      %538 = vmatprep.subr.mxu0 0.0
      %539 = vmatpush1.msra.mxu0 0.0
      %540 = vmatprep.subr.mxu0 0.0
      %541 = vmatpush1.msra.mxu0 0.0
      %542 = vmatprep.subr.mxu0 0.0
      %543 = vmatpush1.msra.mxu0 0.0
      %544 = vmatprep.subr.mxu0 0.0
      %545 = vmatpush1.msra.mxu0 0.0
      %546 = vmatprep.subr.mxu0 0.0
      %547 = vmatpush1.msra.mxu0 0.0
      %548 = vmatprep.subr.mxu0 0.0
      %549 = vmatpush1.msra.mxu0 0.0
      %550 = vmatprep.mubr.f32.mxu0 0.0
      %551 = vmatmul.mubr.f32.gmra.mrb[0].mxu0 %v439
      %v552 = vpop.f32.mrb[0].mxu0
      %v553 = vadd.f32 %v421, %v552
      %v554 = vpop.f32.mrb[0].mxu0
      %555 = vmatprep.mubr.f32.mxu0 0.0
      %556 = vmatmul.mubr.f32.gmra.mrb[0].mxu0 %v442
      %v557 = vpop.f32.mrb[0].mxu0
      %v558 = vadd.f32 %v422, %v557
      %v559 = vpop.f32.mrb[0].mxu0
      %560 = vmatprep.mubr.f32.mxu0 0.0
      %561 = vmatmul.mubr.f32.gmra.mrb[0].mxu0 %v445
      %v562 = vpop.f32.mrb[0].mxu0
      %v563 = vadd.f32 %v423, %v562
      %v564 = vpop.f32.mrb[0].mxu0
      %565 = vmatprep.mubr.f32.mxu0 0.0
      %566 = vmatmul.mubr.f32.gmra.mrb[0].mxu0 %v448
      %v567 = vpop.f32.mrb[0].mxu0
      %v568 = vadd.f32 %v424, %v567
      %v569 = vpop.f32.mrb[0].mxu0
      %570 = vmatprep.mubr.f32.mxu0 0.0
      %571 = vmatmul.mubr.f32.gmra.mrb[0].mxu0 %v451
      %v572 = vpop.f32.mrb[0].mxu0
      %v573 = vadd.f32 %v425, %v572
      %v574 = vpop.f32.mrb[0].mxu0
      %575 = vmatprep.mubr.f32.mxu0 0.0
      %576 = vmatmul.mubr.f32.gmra.mrb[0].mxu0 %v454
      %v577 = vpop.f32.mrb[0].mxu0
      %v578 = vadd.f32 %v426, %v577
      %v579 = vpop.f32.mrb[0].mxu0
      %580 = vmatprep.mubr.f32.mxu0 0.0
      %581 = vmatmul.mubr.f32.gmra.mrb[0].mxu0 %v457
      %v582 = vpop.f32.mrb[0].mxu0
      %v583 = vadd.f32 %v427, %v582
      %v584 = vpop.f32.mrb[0].mxu0
      %585 = vmatprep.mubr.f32.mxu0 0.0
      %586 = vmatmul.mubr.f32.gmra.mrb[0].mxu0 %v460
      %v587 = vpop.f32.mrb[0].mxu0
      %v588 = vadd.f32 %v428, %v587
      %v589 = vpop.f32.mrb[0].mxu0
      %590 = vmatprep.mubr.f32.mxu0 0.0
      %591 = vmatmul.mubr.f32.gmra.mrb[0].mxu0 %v463
      %v592 = vpop.f32.mrb[0].mxu0
      %v593 = vadd.f32 %v429, %v592
      %v594 = vpop.f32.mrb[0].mxu0
      %595 = vmatprep.mubr.f32.mxu0 0.0
      %596 = vmatmul.mubr.f32.gmra.mrb[0].mxu0 %v466
      %v597 = vpop.f32.mrb[0].mxu0
      %v598 = vadd.f32 %v430, %v597
      %v599 = vpop.f32.mrb[0].mxu0
      %600 = vmatprep.mubr.f32.mxu0 0.0
      %601 = vmatmul.mubr.f32.gmra.mrb[0].mxu0 %v469
      %v602 = vpop.f32.mrb[0].mxu0
      %v603 = vadd.f32 %v431, %v602
      %v604 = vpop.f32.mrb[0].mxu0
      %605 = vmatprep.mubr.f32.mxu0 0.0
      %606 = vmatmul.mubr.f32.gmra.mrb[0].mxu0 %v472
      %v607 = vpop.f32.mrb[0].mxu0
      %v608 = vadd.f32 %v432, %v607
      %v609 = vpop.f32.mrb[0].mxu0
      %610 = vmatprep.mubr.f32.mxu0 0.0
      %611 = vmatmul.mubr.f32.gmra.mrb[0].mxu0 %v475
      %v612 = vpop.f32.mrb[0].mxu0
      %v613 = vadd.f32 %v433, %v612
      %v614 = vpop.f32.mrb[0].mxu0
      %615 = vmatprep.mubr.f32.mxu0 0.0
      %616 = vmatmul.mubr.f32.gmra.mrb[0].mxu0 %v478
      %v617 = vpop.f32.mrb[0].mxu0
      %v618 = vadd.f32 %v434, %v617
      %v619 = vpop.f32.mrb[0].mxu0
      %620 = vmatprep.mubr.f32.mxu0 0.0
      %621 = vmatmul.mubr.f32.gmra.mrb[0].mxu0 %v481
      %v622 = vpop.f32.mrb[0].mxu0
      %v623 = vadd.f32 %v435, %v622
      %v624 = vpop.f32.mrb[0].mxu0
      %625 = vmatprep.mubr.f32.mxu0 0.0
      %626 = vmatmul.mubr.f32.gmra.mrb[0].mxu0 %v484
      %v627 = vpop.f32.mrb[0].mxu0
      %v628 = vadd.f32 %v436, %v627
      %v629 = vpop.f32.mrb[0].mxu0
      %630 = vdwg.mxu0
      %vm631 = vcmask 7168
      %632 = vst.msk [vmem:[%s286] sm:$0xff] %vm631, %v553
      %633 = vst.msk [vmem:[%s286 + $0x8] sm:$0xff] %vm631, %v558
      %634 = vst.msk [vmem:[%s286 + $0x10] sm:$0xff] %vm631, %v563
      %635 = vst.msk [vmem:[%s286 + $0x18] sm:$0xff] %vm631, %v568
      %636 = vst.msk [vmem:[%s286 + $0x20] sm:$0xff] %vm631, %v573
      %637 = vst.msk [vmem:[%s286 + $0x28] sm:$0xff] %vm631, %v578
      %638 = vst.msk [vmem:[%s286 + $0x30] sm:$0xff] %vm631, %v583
      %639 = vst.msk [vmem:[%s286 + $0x38] sm:$0xff] %vm631, %v588
      %640 = vst.msk [vmem:[%s286 + $0x40] sm:$0xff] %vm631, %v593
      %641 = vst.msk [vmem:[%s286 + $0x48] sm:$0xff] %vm631, %v598
      %642 = vst.msk [vmem:[%s286 + $0x50] sm:$0xff] %vm631, %v603
      %643 = vst.msk [vmem:[%s286 + $0x58] sm:$0xff] %vm631, %v608
      %644 = vst.msk [vmem:[%s286 + $0x60] sm:$0xff] %vm631, %v613
      %645 = vst.msk [vmem:[%s286 + $0x68] sm:$0xff] %vm631, %v618
      %646 = vst.msk [vmem:[%s286 + $0x70] sm:$0xff] %vm631, %v623
      %647 = vst.msk [vmem:[%s286 + $0x78] sm:$0xff] %vm631, %v628
      %p648 = scmp.lt.s32.totalorder %s19, 1
      %s649 = scalar_select %p648, %s19, 1
      %s650 = smul.addr %s649, 16
      %s651 = smul.addr %s650, 8
      %s652 = scalar_lea.vmem %s6, %s651
      %p653 = scmp.lt.s32.totalorder %s19, 1
      %s654 = scalar_select %p653, %s19, 1
      %s655 = smul.addr %s654, 2
      %s656 = smul.addr %s655, 8
      %s657 = scalar_lea.vmem %s7, %s656
      // Predicated region
      $region45: #{lll_net_forward.1} parent=43 // pred_check
        %p658 = pneg %p168
      $region46: #{lll_net_forward.1} parent=43 // pred_check_branch
        %660 = sbr.rel (%p658) target = $region48
      $region47: #{lll_net_forward.1} parent=43 // pred_region
        _
      $region48: #{lll_net_forward.1} parent=43 // pred_fallthru
        _
      // Predicated region
      $region49: #{lll_net_forward.1} parent=43 // pred_check
        %p661 = pneg %p194
      $region50: #{lll_net_forward.1} parent=43 // pred_check_branch
        %663 = sbr.rel (%p661) target = $region52
      $region51: #{lll_net_forward.1} parent=43 // pred_region
        _
      $region52: #{lll_net_forward.1} parent=43 // pred_fallthru
        _
    $region44: #{lll_net_forward.1} parent=5 // pred_fallthru
      _
    %p664 = scmp.le.s32.totalorder 2, %s14
    // Predicated region
    $region53: #{lll_net_forward.1} parent=5 // pred_check
      %p665 = pneg %p664
    $region54: #{lll_net_forward.1} parent=5 // pred_check_branch
      %667 = sbr.rel (%p665) target = $region56
    $region55: #{lll_net_forward.1} parent=5 // pred_region
      %s668 = ssub.s32 %s14, 2
      // Predicated region
      $region57: #{lll_net_forward.1} parent=55 // pred_check
        %p669 = pneg %p174
      $region58: #{lll_net_forward.1} parent=55 // pred_check_branch
        %671 = sbr.rel (%p669) target = $region60
      $region59: #{lll_net_forward.1} parent=55 // pred_region
        %p672 = scmp.lt.s32.totalorder %s20, 1
        %s673 = scalar_select %p672, %s20, 1
        %s674 = smul.addr %s673, 16
        %s675 = smul.addr %s674, 8
        %s676 = scalar_lea.vmem %s6, %s675
      $region60: #{lll_net_forward.1} parent=55 // pred_fallthru
        _
      // Predicated region
      $region61: #{lll_net_forward.1} parent=55 // pred_check
        %p677 = pneg %p200
      $region62: #{lll_net_forward.1} parent=55 // pred_check_branch
        %679 = sbr.rel (%p677) target = $region64
      $region63: #{lll_net_forward.1} parent=55 // pred_region
        %p680 = scmp.lt.s32.totalorder %s20, 1
        %s681 = scalar_select %p680, %s20, 1
        %s682 = smul.addr %s681, 2
        %s683 = smul.addr %s682, 8
        %s684 = scalar_lea.vmem %s7, %s683
      $region64: #{lll_net_forward.1} parent=55 // pred_fallthru
        _
    $region56: #{lll_net_forward.1} parent=5 // pred_fallthru
      _
  $region6: #{lll_net_forward.1} parent=0 // loop_footer
    %s18 = sadd.s32 1, %s14
  $region7: #{lll_net_forward.1} parent=0 // loop_footer_branch
    %13 = sbr.rel target = $region3
  $region8: #{lll_net_forward.1} parent=0 // loop_exit
    _

</llo_original>
